<compile_context>
chip_gen: v7x
topology: tpu7x:2x2x1
jax: 0.10.0
libtpu: 0.0.40
codegen_flags: <defaults>
</compile_context>

<pallas_src>
import jax
import jax.numpy as jnp
from jax.experimental import pallas as pl
from jax.experimental.pallas import tpu as pltpu


def _copy_kernel(x_ref, o_ref):
    # Straight VMEM copy of the current tile (identity forward).
    o_ref[...] = x_ref[...]


_TILE_BYTES = 4 << 20  # 4 MiB blocks: ~85% of HBM roofline, 4 live buffers = 16 MiB.


def _vmem_limit_bytes() -> int:
    """Scoped-VMEM limit with headroom on every TPU generation."""
    try:
        cap = int(getattr(pltpu.get_tpu_info(), "vmem_capacity_bytes", 64 << 20))
    except Exception:
        cap = 64 << 20  # conservative: assume v7x-class (64 MiB physical per TC)
    # Half the physical capacity, capped at 64 MiB:
    #   v5e/v6e (128 MiB physical) -> 64 MiB scoped; v7x (64 MiB) -> 32 MiB scoped.
    return min(64 << 20, cap // 2)


def _pick_tm(lead: int, tm_target: int, sub: int) -> int:
    """Sublane-aligned tile row count, preferring one that divides `lead` evenly."""
    tm_target = max(sub, (tm_target // sub) * sub)
    if tm_target >= lead:
        return lead  # whole array in one tile (full-extent block is always legal)
    t = tm_target
    floor = max(sub, tm_target // 2)
    while t >= floor:
        if lead % t == 0:
            return t  # evenly dividing tile: no ragged tail, no masked stores
        t -= sub
    return tm_target  # accept a ragged tail; Pallas edge-masks the last block


def _identity_copy_pallas(x: jax.Array, *, donate_input: bool = False) -> jax.Array:
    """Streaming HBM copy of x (identity semantics) through a pipelined Pallas grid."""
    orig_shape = x.shape
    dtype = x.dtype
    size = int(x.size)
    if size == 0:
        return x

    itemsize = jnp.dtype(dtype).itemsize
    # Native packed sublane tile: 8 rows for f32, 16 for bf16/f16, 32 for int8/fp8.
    sub = max(8, 32 // itemsize)

    # Lane-dense last dim: widest power-of-two multiple of 128 that divides size.
    lane = 0
    for cand in (4096, 2048, 1024, 512, 256, 128):
        if size % cand == 0:
            lane = cand
            break

    if lane:
        lead = size // lane
        tm = _pick_tm(lead, _TILE_BYTES // (lane * itemsize), sub)
        x2d = x.reshape(lead, lane)
        block = (tm, lane)
        grid = (pl.cdiv(lead, tm),)
        index_map = lambda i: (i, 0)
    else:
        # size % 128 != 0: stream the flat array as (1, TILE) chunks so large
        # odd-sized tensors never exceed VMEM (no single full-array block).
        tile = max(128, ((_TILE_BYTES // itemsize) // 128) * 128)
        tile = min(tile, size)
        x2d = x.reshape(1, size)
        block = (1, tile)
        grid = (pl.cdiv(size, tile),)
        index_map = lambda i: (0, i)

    out = pl.pallas_call(
        _copy_kernel,
        out_shape=jax.ShapeDtypeStruct(x2d.shape, dtype),
        grid=grid,
        in_specs=[pl.BlockSpec(block, index_map)],
        out_specs=pl.BlockSpec(block, index_map),
        # Alias only when the caller actually donates x at the jit boundary;
        # otherwise XLA inserts a defensive copy (an extra hidden read+write stream).
        input_output_aliases=({0: 0} if donate_input else {}),
        cost_estimate=pl.CostEstimate(
            flops=0, transcendentals=0, bytes_accessed=2 * size * itemsize),
        compiler_params=pltpu.CompilerParams(
            dimension_semantics=("parallel",),   # v7x: shard the copy over 2 TCs
            vmem_limit_bytes=_vmem_limit_bytes(),
        ),
    )(x2d)

    return out.reshape(orig_shape)


def identity(x: jax.Array, *, force_kernel: bool = False,
             donate_input: bool = False) -> jax.Array:
    """Identity.forward(x): returns x.

    Default path does zero data movement (the correct implementation of identity).
    force_kernel=True routes through the Pallas streaming-copy kernel
    (2*size bytes of HBM traffic) for benchmarking the kernel path.
    """
    if not force_kernel:
        return x
    return _identity_copy_pallas(x, donate_input=donate_input)


if __name__ == "__main__":
    key = jax.random.PRNGKey(0)
    # NCHW, small shapes consistent with the module: batch=2, channels=4, spatial=16
    x = jax.random.normal(key, (2, 4, 16, 16), dtype=jnp.float32)

    # True identity (no kernel, no HBM traffic) -- the recommended default.
    y_fast = identity(x)

    # Pallas streaming-copy path, exercised once for the benchmark harness.
    y_kernel = identity(x, force_kernel=True)
    jax.block_until_ready(y_kernel)

    assert y_fast.shape == x.shape and y_fast.dtype == x.dtype
    assert y_kernel.shape == x.shape and y_kernel.dtype == x.dtype
    assert bool(jnp.all(y_fast == x))
    assert bool(jnp.all(y_kernel == x))
    print("KERNEL_OK")
</pallas_src>

<mosaic_0001>
module attributes {stable_mosaic.version = 11 : i64} {
  func.func @_copy_kernel(%arg0: i32, %arg1: memref<1x2048xf32, #tpu.memory_space<vmem>>, %arg2: memref<1x2048xf32, #tpu.memory_space<vmem>>) attributes {dimension_semantics = [#tpu.dimension_semantics<parallel>], iteration_bounds = array<i64: 1>, scalar_prefetch = 0 : i64, scratch_operands = 0 : i64, tpu.core_type = #tpu.core_type<tc>, window_params = [{transform_indices = @transform_0, window_bounds = array<i64: 1, 2048>}, {transform_indices = @transform_1, window_bounds = array<i64: 1, 2048>}]} {
    %c0 = arith.constant 0 : index
    %c0_0 = arith.constant 0 : index
    %0 = vector.load %arg1[%c0, %c0_0] : memref<1x2048xf32, #tpu.memory_space<vmem>>, vector<1x2048xf32>
    %c0_1 = arith.constant 0 : index
    %c0_2 = arith.constant 0 : index
    %1 = vector.load %arg2[%c0_1, %c0_2] : memref<1x2048xf32, #tpu.memory_space<vmem>>, vector<1x2048xf32>
    tpu.vector_store %arg2[%c0_1, %c0_2], %0 {strides = array<i32>} : memref<1x2048xf32, #tpu.memory_space<vmem>>, vector<1x2048xf32>,
    return
  }
  func.func @transform_0(%arg0: i32) -> (i32, i32) {
    %c0_i32 = arith.constant 0 : i32
    %c0_i32_0 = arith.constant 0 : i32
    return %arg0, %c0_i32 : i32, i32
  }
  func.func @transform_1(%arg0: i32) -> (i32, i32) {
    %c0_i32 = arith.constant 0 : i32
    %c0_i32_0 = arith.constant 0 : i32
    return %arg0, %c0_i32 : i32, i32
  }
}

</mosaic_0001>

<llo_original>
// kernel: tpu_custom_call.1
$region0: #{tpu_custom_call.1}
  #allocation0 [shape = 'u32[]', space=smem, size = 0x4, offset = 0x4, fixed_abs, tag = 'smem constant byte address 0x4 - core index']
  #allocation1 [shape = 'u32[144,128]{1,0:T(1,128)}', space=vmem, size = 0x12000, scoped, tag = 'internal scratch']
  %s0 = inlined_call_operand.hbm [shape: f32[1,2048], index: 0, kind: input, shape index: {}]
  %s1 = inlined_call_operand.hbm [shape: f32[1,2048], index: 1, kind: output, shape index: {}]
  %s2 = sld [smem:[#allocation0]]
  $region18: #{tpu_custom_call.1} parent=0
    _
  %s4 = ssub.s32 1, %s2
  %s5 = scalar_select 0, %s4, %s2
  $region1: #{tpu_custom_call.1} parent=0
    #allocation2 [shape = 'u8[8192]{0}', space=vmem, size = 0x2000, scoped, tag = 'input window, operand 0, single buffered']
    #allocation3 [shape = 's32[1]{0}', space=sflag, size = 0x4, scoped, tag = 'scoped memory for tpu_custom_call.1']
    #allocation4 [shape = 's32[1]{0}', space=sflag, size = 0x4, scoped, tag = 'scoped memory for tpu_custom_call.1']
    #allocation5 [shape = 'u8[8192]{0}', space=vmem, size = 0x2000, scoped, tag = 'output window, operand 0, single buffered']
    %6 = vsyncpa [#allocation3], 0
    %7 = vsyncpa [#allocation4], 0
    // Predicated region
    $region2: #{tpu_custom_call.1} parent=1 // pred_check
      _
    $region3: #{tpu_custom_call.1} parent=1 // pred_check_branch
      %9 = sbr.rel (0) target = $region5
    $region4: #{tpu_custom_call.1} parent=1 // pred_region
      %s11 = ssub.s32 256, 256
      %12 = vsyncadd [#allocation3], %s11
      %s14 = sshll.u32 [#allocation2], 4
      %s15 = int_to_ptr.vmem [resolvable:$true] %s14
      %17 = dma.hbm_to_vmem [thread:$0]  %s0, 256, %s15, [#allocation3]
    $region5: #{tpu_custom_call.1} parent=1 // pred_fallthru
      _
    // Predicated region
    $region6: #{tpu_custom_call.1} parent=1 // pred_check
      _
    $region7: #{tpu_custom_call.1} parent=1 // pred_check_branch
      %19 = sbr.rel (0) target = $region9
    $region8: #{tpu_custom_call.1} parent=1 // pred_region
      %20 = dma.done [#allocation3], 256
    $region9: #{tpu_custom_call.1} parent=1 // pred_fallthru
      _
    %v21 = vld [vmem:[#allocation2] sm:$0xff]
    %v22 = vld [vmem:[#allocation2 + $0x8] sm:$0xff]
    %23 = vst [vmem:[#allocation5] sm:$0xff] %v21
    %24 = vst [vmem:[#allocation5 + $0x8] sm:$0xff] %v22
    // Predicated region
    $region10: #{tpu_custom_call.1} parent=1 // pred_check
      _
    $region11: #{tpu_custom_call.1} parent=1 // pred_check_branch
      %26 = sbr.rel (0) target = $region13
    $region12: #{tpu_custom_call.1} parent=1 // pred_region
      %s28 = ssub.s32 256, 256
      %29 = vsyncadd [#allocation4], %s28
      %s31 = sshll.u32 [#allocation5], 4
      %s32 = int_to_ptr.vmem [resolvable:$true] %s31
      %34 = dma.vmem_to_hbm [thread:$0]  %s32, 256, %s1, [#allocation4]
    $region13: #{tpu_custom_call.1} parent=1 // pred_fallthru
      _
    // Predicated region
    $region14: #{tpu_custom_call.1} parent=1 // pred_check
      _
    $region15: #{tpu_custom_call.1} parent=1 // pred_check_branch
      %36 = sbr.rel (0) target = $region17
    $region16: #{tpu_custom_call.1} parent=1 // pred_region
      %37 = dma.done [#allocation4], 256
    $region17: #{tpu_custom_call.1} parent=1 // pred_fallthru
      _
    %38 = vsyncpa [#allocation3], 1
    %39 = vsyncpa [#allocation4], 1

</llo_original>
